<compile_context>
chip_gen: v6e
topology: v6e:2x2x1
jax: 0.10.0
libtpu: 0.0.40
codegen_flags: <defaults>
</compile_context>

<pallas_src>
import functools

import jax
import jax.numpy as jnp
from jax import lax
from jax.experimental import pallas as pl
from jax.experimental.pallas import tpu as pltpu


def _round_up(v, m):
    return -(-v // m) * m


def _softmax_phi_kernel(x_ref, w_ref, y_ref, out_ref, *, n_rows, row_tile):
    """One grid step: `row_tile` rows -> one per-tile scalar Phi contribution."""
    i = pl.program_id(0)

    # MXU matmul in native input dtype, f32 accumulation.
    d = jnp.dot(x_ref[...], w_ref[...], preferred_element_type=jnp.float32)   # (t, C)
    d = d - jnp.max(d, axis=1, keepdims=True)
    a = jnp.log(jnp.sum(jnp.exp(d), axis=1, keepdims=True))                   # (t, 1)
    b = jnp.sum(d * y_ref[...].astype(jnp.float32), axis=1, keepdims=True)    # (t, 1)

    # Inputs are NOT padded in HBM; a boundary tile's tail rows hold stale data.
    # The select below discards them (NaN/Inf in dead rows cannot leak through
    # a select).  Forward-only; a custom VJP would need the mask before exp.
    rows = i * row_tile + lax.broadcasted_iota(jnp.int32, (row_tile, 1), 0)
    contrib = jnp.where(rows < n_rows, a - b, 0.0)

    # Per-tile scalar, written as a lane-dense (8,128) f32 block so the output
    # path is one unmasked vector store (no lane-width-1 vst.msk / sparse DMA).
    out_ref[...] = jnp.full((1, 8, 128), jnp.sum(contrib), dtype=jnp.float32)


def _vmem_capacity_bytes():
    try:
        info = pltpu.get_tpu_info()
        cap = getattr(info, "vmem_capacity_bytes", None)
        if cap:
            return int(cap)
    except Exception:
        pass
    return 128 * 1024 * 1024            # v5e / v6e default


def _pick_row_tile(N, F, C, x_dtype, y_dtype, w_dtype, budget_bytes):
    """Largest row tile whose working set fits the VMEM budget on all generations.

    Counts double-buffered x/y blocks, the resident (double-buffer reserved) W
    block, and the lane-padded f32 intermediates so the tile is valid on
    64-MiB-VMEM v7x as well as 128-MiB v5e/v6e.
    """
    gran = 256                                   # full MXU LHS passes; also /128 for v5e
    lane = 128
    x_b = jnp.dtype(x_dtype).itemsize
    y_b = jnp.dtype(y_dtype).itemsize
    w_b = jnp.dtype(w_dtype).itemsize
    f_pad = _round_up(F, lane)
    c_pad = _round_up(C, lane)

    resident = 2 * _round_up(F, 8) * c_pad * w_b + 2 * 8 * lane * 4   # W (2 bufs) + out block
    per_row = (2 * f_pad * x_b                   # x tile (double-buffered)
               + 2 * c_pad * y_b                 # y tile (double-buffered)
               + 3 * c_pad * 4                   # f32 D / exp(D) / D*y
               + 4 * lane * 4)                   # per-row (t,1) temporaries (max, A, B, mask)

    avail = max(int(budget_bytes) - resident, gran * per_row)
    t = (avail // per_row // gran) * gran
    t = max(gran, min(int(t), 16384))            # bytes-based cap; 16k rows amortizes step cost

    if t >= N:
        if N >= 2 * gran:
            # Whole problem would fit in one tile: split into >=2 grid steps so
            # the "parallel" axis feeds both v7x TensorCores.
            t = min(t, _round_up(-(-N // 2), gran))
        else:
            t = N                                # single block == full array (always legal)
    return int(t)


def softmax_loss(x, W, y, *, row_tile=None):
    """Pallas equivalent of softmax.forward(x, y) -> (Phi, L2)."""
    N, F = x.shape
    Fw, C = W.shape
    assert Fw == F and y.shape == (N, C)

    vmem_limit = min((_vmem_capacity_bytes() * 3) // 4, 96 * 1024 * 1024)

    if row_tile is None:
        row_tile = _pick_row_tile(N, F, C, x.dtype, y.dtype, W.dtype,
                                  budget_bytes=int(vmem_limit * 0.85))
    else:
        row_tile = int(row_tile)
        if row_tile >= N:
            row_tile = N                         # full-array block is always legal
        else:
            row_tile = max(8, (row_tile // 8) * 8)

    n_tiles = pl.cdiv(N, row_tile)

    kernel = functools.partial(_softmax_phi_kernel, n_rows=N, row_tile=row_tile)

    per_tile = pl.pallas_call(
        kernel,
        out_shape=jax.ShapeDtypeStruct((n_tiles, 8, 128), jnp.float32),
        grid_spec=pltpu.PrefetchScalarGridSpec(
            num_scalar_prefetch=0,
            grid=(n_tiles,),
            in_specs=[
                pl.BlockSpec((row_tile, F), lambda i: (i, 0)),   # x row tile
                pl.BlockSpec((F, C), lambda i: (0, 0)),          # W resident across grid
                pl.BlockSpec((row_tile, C), lambda i: (i, 0)),   # y row tile
            ],
            out_specs=pl.BlockSpec((1, 8, 128), lambda i: (i, 0, 0)),
        ),
        compiler_params=pltpu.CompilerParams(
            dimension_semantics=("parallel",),   # no carried state -> v7x megacore-friendly
            vmem_limit_bytes=vmem_limit,
        ),
    )(x, W, y)

    phi = jnp.sum(per_tile[:, 0, 0])
    w32 = W.astype(jnp.float32)
    l2 = jnp.sum(w32 * w32)                      # one-off O(F*C); cheaper in the wrapper
    return phi, l2


def _reference(x, W, y):
    d = x.astype(jnp.float32) @ W.astype(jnp.float32)
    d = d - jnp.max(d, axis=1, keepdims=True)
    a = jnp.log(jnp.sum(jnp.exp(d), axis=1))
    b = jnp.sum(d * y.astype(jnp.float32), axis=1)
    return jnp.sum(a - b), jnp.sum(W.astype(jnp.float32) ** 2)


if __name__ == "__main__":
    # Small deterministic shapes consistent with the module: N samples, F features, C classes.
    # N=60 is intentionally not a multiple of 8 to exercise the masked ragged-tail path.
    N, F, C = 60, 32, 16
    key = jax.random.PRNGKey(0)
    kx, kw, ky = jax.random.split(key, 3)

    x = jax.random.normal(kx, (N, F), dtype=jnp.float32)
    W = 0.1 * jax.random.normal(kw, (F, C), dtype=jnp.float32)
    labels = jax.random.randint(ky, (N,), 0, C)
    y = jax.nn.one_hot(labels, C, dtype=jnp.float32)

    phi_ref, l2_ref = _reference(x, W, y)

    # 1) auto tile (single block covering all rows)
    phi, l2 = softmax_loss(x, W, y)
    phi = jax.block_until_ready(phi)
    l2 = jax.block_until_ready(l2)
    assert jnp.allclose(phi, phi_ref, rtol=1e-5, atol=1e-4), (phi, phi_ref)
    assert jnp.allclose(l2, l2_ref, rtol=1e-5, atol=1e-5), (l2, l2_ref)

    # 2) forced small tile: multi-tile grid + boundary block + in-kernel row mask
    phi2, l22 = softmax_loss(x, W, y, row_tile=16)
    phi2 = jax.block_until_ready(phi2)
    l22 = jax.block_until_ready(l22)
    assert jnp.allclose(phi2, phi_ref, rtol=1e-5, atol=1e-4), (phi2, phi_ref)
    assert jnp.allclose(l22, l2_ref, rtol=1e-5, atol=1e-5), (l22, l2_ref)

    print("KERNEL_OK")
</pallas_src>

<mosaic_0001>
module attributes {stable_mosaic.version = 11 : i64} {
  func.func @_softmax_phi_kernel(%arg0: i32, %arg1: memref<60x32xf32, #tpu.memory_space<vmem>>, %arg2: memref<32x16xf32, #tpu.memory_space<vmem>>, %arg3: memref<60x16xf32, #tpu.memory_space<vmem>>, %arg4: memref<1x8x128xf32, #tpu.memory_space<vmem>>) attributes {dimension_semantics = [#tpu.dimension_semantics<parallel>], iteration_bounds = array<i64: 1>, scalar_prefetch = 0 : i64, scratch_operands = 0 : i64, tpu.core_type = #tpu.core_type<tc>, window_params = [{transform_indices = @transform_0, window_bounds = array<i64: 60, 32>}, {pipeline_mode = #tpu.pipeline_mode<synchronous>, transform_indices = @transform_1, window_bounds = array<i64: 32, 16>}, {transform_indices = @transform_2, window_bounds = array<i64: 60, 16>}, {transform_indices = @transform_3, window_bounds = array<i64: 1, 8, 128>}]} {
    %c0 = arith.constant 0 : index
    %c0_0 = arith.constant 0 : index
    %0 = vector.load %arg1[%c0, %c0_0] : memref<60x32xf32, #tpu.memory_space<vmem>>, vector<60x32xf32>
    %c0_1 = arith.constant 0 : index
    %c0_2 = arith.constant 0 : index
    %1 = vector.load %arg2[%c0_1, %c0_2] : memref<32x16xf32, #tpu.memory_space<vmem>>, vector<32x16xf32>
    %cst = arith.constant dense<0.000000e+00> : vector<60x16xf32>
    %2 = tpu.matmul %0, %1, %cst {dimension_numbers = #tpu.dot_dimension_numbers<[1], [0], [0], [1], [0, 0, 1, 1], [], []>} : vector<60x32xf32>, vector<32x16xf32>, vector<60x16xf32> -> vector<60x16xf32>
    %cst_3 = arith.constant dense<0xFF800000> : vector<60xf32>
    %3 = vector.multi_reduction <maximumf>, %2, %cst_3 [1] : vector<60x16xf32> to vector<60xf32>
    %4 = vector.shape_cast %3 : vector<60xf32> to vector<60x1xf32>
    %5 = vector.broadcast %4 : vector<60x1xf32> to vector<60x16xf32>
    %6 = arith.subf %2, %5 : vector<60x16xf32>
    %7 = math.exp %6 : vector<60x16xf32>
    %cst_4 = arith.constant dense<0.000000e+00> : vector<60xf32>
    %8 = vector.multi_reduction <add>, %7, %cst_4 [1] : vector<60x16xf32> to vector<60xf32>
    %9 = vector.shape_cast %8 : vector<60xf32> to vector<60x1xf32>
    %10 = math.log %9 : vector<60x1xf32>
    %c0_5 = arith.constant 0 : index
    %c0_6 = arith.constant 0 : index
    %11 = vector.load %arg3[%c0_5, %c0_6] : memref<60x16xf32, #tpu.memory_space<vmem>>, vector<60x16xf32>
    %12 = arith.mulf %6, %11 : vector<60x16xf32>
    %cst_7 = arith.constant dense<0.000000e+00> : vector<60xf32>
    %13 = vector.multi_reduction <add>, %12, %cst_7 [1] : vector<60x16xf32> to vector<60xf32>
    %14 = vector.shape_cast %13 : vector<60xf32> to vector<60x1xf32>
    %c60_i32 = arith.constant 60 : i32
    %15 = arith.muli %arg0, %c60_i32 : i32
    %16 = tpu.iota {dimensions = array<i32: 0>} : vector<60x1xi32>
    %17 = vector.broadcast %15 : i32 to vector<60x1xi32>
    %18 = arith.addi %17, %16 : vector<60x1xi32>
    %c60_i32_8 = arith.constant 60 : i32
    %19 = vector.broadcast %c60_i32_8 : i32 to vector<60x1xi32>
    %20 = arith.cmpi slt, %18, %19 : vector<60x1xi32>
    %21 = arith.subf %10, %14 : vector<60x1xf32>
    %cst_9 = arith.constant 0.000000e+00 : f32
    %22 = vector.broadcast %cst_9 : f32 to vector<60x1xf32>
    %23 = arith.select %20, %21, %22 : vector<60x1xi1>, vector<60x1xf32>
    %24 = vector.shape_cast %23 : vector<60x1xf32> to vector<1x60x1xf32>
    %cst_10 = arith.constant dense<0.000000e+00> : vector<1xf32>
    %25 = vector.multi_reduction <add>, %24, %cst_10 [1, 2] : vector<1x60x1xf32> to vector<1xf32>
    %26 = vector.shape_cast %25 : vector<1xf32> to vector<1x1x1xf32>
    %27 = vector.extract %26[0, 0, 0] : f32 from vector<1x1x1xf32>
    %28 = vector.broadcast %27 : f32 to vector<1x8x128xf32>
    %c0_11 = arith.constant 0 : index
    %c0_12 = arith.constant 0 : index
    %c0_13 = arith.constant 0 : index
    %29 = vector.load %arg4[%c0_11, %c0_12, %c0_13] : memref<1x8x128xf32, #tpu.memory_space<vmem>>, vector<1x8x128xf32>
    tpu.vector_store %arg4[%c0_11, %c0_12, %c0_13], %28 {strides = array<i32>} : memref<1x8x128xf32, #tpu.memory_space<vmem>>, vector<1x8x128xf32>,
    return
  }
  func.func @transform_0(%arg0: i32) -> (i32, i32) {
    %c0_i32 = arith.constant 0 : i32
    %c0_i32_0 = arith.constant 0 : i32
    return %arg0, %c0_i32 : i32, i32
  }
  func.func @transform_1(%arg0: i32) -> (i32, i32) {
    %c0_i32 = arith.constant 0 : i32
    %c0_i32_0 = arith.constant 0 : i32
    %c0_i32_1 = arith.constant 0 : i32
    return %c0_i32, %c0_i32_0 : i32, i32
  }
  func.func @transform_2(%arg0: i32) -> (i32, i32) {
    %c0_i32 = arith.constant 0 : i32
    %c0_i32_0 = arith.constant 0 : i32
    return %arg0, %c0_i32 : i32, i32
  }
  func.func @transform_3(%arg0: i32) -> (i32, i32, i32) {
    %c0_i32 = arith.constant 0 : i32
    %c0_i32_0 = arith.constant 0 : i32
    %c0_i32_1 = arith.constant 0 : i32
    return %arg0, %c0_i32, %c0_i32_0 : i32, i32, i32
  }
}

</mosaic_0001>

<llo_original>
// kernel: tpu_custom_call.1
$region0: #{tpu_custom_call.1}
  #allocation0 [shape = 'u32[]', space=smem, size = 0x4, offset = 0x4, fixed_abs, tag = 'smem constant byte address 0x4 - core index']
  #allocation1 [shape = 'u32[144,128]{1,0:T(1,128)}', space=vmem, size = 0x12000, scoped, tag = 'internal scratch']
  %s0 = inlined_call_operand.vmem [shape: f32[60,32], index: 0, kind: input, shape index: {}]
  %s1 = inlined_call_operand.vmem [shape: f32[32,16], index: 1, kind: input, shape index: {}]
  %s2 = inlined_call_operand.vmem [shape: f32[60,16], index: 2, kind: input, shape index: {}]
  %s3 = inlined_call_operand.hbm [shape: f32[1,8,128], index: 3, kind: output, shape index: {}]
  %s4 = sld [smem:[#allocation0]]
  $region22: #{tpu_custom_call.1} parent=0
    _
  %s6 = ssub.s32 1, %s4
  %s7 = scalar_select 0, %s6, %s4
  $region1: #{tpu_custom_call.1} parent=0
    #allocation2 [shape = 'u8[4096]{0}', space=vmem, size = 0x1000, scoped, tag = 'output window, operand 0, single buffered']
    #allocation3 [shape = 's32[1]{0}', space=sflag, size = 0x4, scoped, tag = 'scoped memory for tpu_custom_call.1']
    %8 = vsyncpa [#allocation3], 0
    // Predicated region
    $region2: #{tpu_custom_call.1} parent=1 // pred_check
      _
    $region3: #{tpu_custom_call.1} parent=1 // pred_check_branch
      %10 = sbr.rel (0) target = $region5
    $region4: #{tpu_custom_call.1} parent=1 // pred_region
      _
    $region5: #{tpu_custom_call.1} parent=1 // pred_fallthru
      _
    // Predicated region
    $region6: #{tpu_custom_call.1} parent=1 // pred_check
      _
    $region7: #{tpu_custom_call.1} parent=1 // pred_check_branch
      %12 = sbr.rel (0) target = $region9
    $region8: #{tpu_custom_call.1} parent=1 // pred_region
      _
    $region9: #{tpu_custom_call.1} parent=1 // pred_fallthru
      _
    // Predicated region
    $region10: #{tpu_custom_call.1} parent=1 // pred_check
      _
    $region11: #{tpu_custom_call.1} parent=1 // pred_check_branch
      %14 = sbr.rel (0) target = $region13
    $region12: #{tpu_custom_call.1} parent=1 // pred_region
      _
    $region13: #{tpu_custom_call.1} parent=1 // pred_fallthru
      _
    %v15 = vld [vmem:[%s0] sm:$0xff]
    %v16 = vld [vmem:[%s0 + $0x8] sm:$0xff]
    %v17 = vld [vmem:[%s0 + $0x10] sm:$0xff]
    %v18 = vld [vmem:[%s0 + $0x18] sm:$0xff]
    %v19 = vld [vmem:[%s0 + $0x20] sm:$0xff]
    %v20 = vld [vmem:[%s0 + $0x28] sm:$0xff]
    %v21 = vld [vmem:[%s0 + $0x30] sm:$0xff]
    %v22 = vld [vmem:[%s0 + $0x38] sm:$0xf]
    %v23 = vld [vmem:[%s1] sm:$0xff]
    %v24 = vld [vmem:[%s1 + $0x8] sm:$0xff]
    %v25 = vld [vmem:[%s1 + $0x10] sm:$0xff]
    %v26 = vld [vmem:[%s1 + $0x18] sm:$0xff]
    %vm27 = vcmask 261120
    %v29 = vsel %vm27, %v15, 0
    %v32 = vsel %vm27, %v16, 0
    %v35 = vsel %vm27, %v17, 0
    %v38 = vsel %vm27, %v18, 0
    %v41 = vsel %vm27, %v19, 0
    %v44 = vsel %vm27, %v20, 0
    %v47 = vsel %vm27, %v21, 0
    %v50 = vsel %vm27, %v22, 0
    %52 = vmatprep.subr.mxu0 0.0
    %53 = vmatpush1.msra.mxu0 0.0
    %54 = vmatprep.subr.mxu0 0.0
    %55 = vmatpush1.msra.mxu0 0.0
    %56 = vmatprep.subr.mxu0 0.0
    %57 = vmatpush1.msra.mxu0 0.0
    %58 = vmatprep.subr.mxu0 0.0
    %59 = vmatpush1.msra.mxu0 0.0
    %60 = vmatprep.subr.mxu0 0.0
    %61 = vmatpush1.msra.mxu0 0.0
    %62 = vmatprep.subr.mxu0 0.0
    %63 = vmatpush1.msra.mxu0 0.0
    %64 = vmatprep.subr.mxu0 0.0
    %65 = vmatpush1.msra.mxu0 0.0
    %66 = vmatprep.subr.mxu0 0.0
    %67 = vmatpush1.msra.mxu0 0.0
    %68 = vmatprep.subr.mxu0 0.0
    %69 = vmatpush1.msra.mxu0 0.0
    %70 = vmatprep.subr.mxu0 0.0
    %71 = vmatpush1.msra.mxu0 0.0
    %72 = vmatprep.subr.mxu0 0.0
    %73 = vmatpush1.msra.mxu0 0.0
    %74 = vmatprep.subr.mxu0 0.0
    %75 = vmatpush1.msra.mxu0 0.0
    %76 = vmatprep.subr.mxu0 0.0
    %77 = vmatpush1.msra.mxu0 %v26
    %78 = vmatprep.subr.mxu0 0.0
    %79 = vmatpush1.msra.mxu0 %v25
    %80 = vmatprep.subr.mxu0 0.0
    %81 = vmatpush1.msra.mxu0 %v24
    %82 = vmatprep.subr.mxu0 0.0
    %83 = vmatpush1.msra.mxu0 %v23
    %84 = vmatprep.subr.mxu0 0.0
    %85 = vmatpush2.msra.mxu0 0.0
    %86 = vmatprep.subr.mxu0 0.0
    %87 = vmatpush2.msra.mxu0 0.0
    %88 = vmatprep.subr.mxu0 0.0
    %89 = vmatpush2.msra.mxu0 0.0
    %90 = vmatprep.subr.mxu0 0.0
    %91 = vmatpush2.msra.mxu0 0.0
    %92 = vmatprep.subr.mxu0 0.0
    %93 = vmatpush2.msra.mxu0 0.0
    %94 = vmatprep.subr.mxu0 0.0
    %95 = vmatpush2.msra.mxu0 0.0
    %96 = vmatprep.subr.mxu0 0.0
    %97 = vmatpush2.msra.mxu0 0.0
    %98 = vmatprep.subr.mxu0 0.0
    %99 = vmatpush2.msra.mxu0 0.0
    %100 = vmatprep.subr.mxu0 0.0
    %101 = vmatpush2.msra.mxu0 0.0
    %102 = vmatprep.subr.mxu0 0.0
    %103 = vmatpush2.msra.mxu0 0.0
    %104 = vmatprep.subr.mxu0 0.0
    %105 = vmatpush2.msra.mxu0 0.0
    %106 = vmatprep.subr.mxu0 0.0
    %107 = vmatpush2.msra.mxu0 0.0
    %108 = vmatprep.subr.mxu0 0.0
    %109 = vmatpush2.msra.mxu0 0.0
    %110 = vmatprep.subr.mxu0 0.0
    %111 = vmatpush2.msra.mxu0 0.0
    %112 = vmatprep.subr.mxu0 0.0
    %113 = vmatpush2.msra.mxu0 0.0
    %114 = vmatprep.subr.mxu0 0.0
    %115 = vmatpush2.msra.mxu0 0.0
    %116 = vmatprep.mubr.f32.mxu0 0.0
    %117 = vmatmul.mubr.f32.gmra.mxu0 %v29
    %v118 = vpop.f32.mrf.mxu0
    %v119 = vadd.f32 0.0, %v118
    %v120 = vpop.f32.mrf.mxu0
    %121 = vmatprep.mubr.f32.mxu0 0.0
    %122 = vmatmul.mubr.f32.gmra.mxu0 %v32
    %v123 = vpop.f32.mrf.mxu0
    %v124 = vadd.f32 0.0, %v123
    %v125 = vpop.f32.mrf.mxu0
    %126 = vmatprep.mubr.f32.mxu0 0.0
    %127 = vmatmul.mubr.f32.gmra.mxu0 %v35
    %v128 = vpop.f32.mrf.mxu0
    %v129 = vadd.f32 0.0, %v128
    %v130 = vpop.f32.mrf.mxu0
    %131 = vmatprep.mubr.f32.mxu0 0.0
    %132 = vmatmul.mubr.f32.gmra.mxu0 %v38
    %v133 = vpop.f32.mrf.mxu0
    %v134 = vadd.f32 0.0, %v133
    %v135 = vpop.f32.mrf.mxu0
    %136 = vmatprep.mubr.f32.mxu0 0.0
    %137 = vmatmul.mubr.f32.gmra.mxu0 %v41
    %v138 = vpop.f32.mrf.mxu0
    %v139 = vadd.f32 0.0, %v138
    %v140 = vpop.f32.mrf.mxu0
    %141 = vmatprep.mubr.f32.mxu0 0.0
    %142 = vmatmul.mubr.f32.gmra.mxu0 %v44
    %v143 = vpop.f32.mrf.mxu0
    %v144 = vadd.f32 0.0, %v143
    %v145 = vpop.f32.mrf.mxu0
    %146 = vmatprep.mubr.f32.mxu0 0.0
    %147 = vmatmul.mubr.f32.gmra.mxu0 %v47
    %v148 = vpop.f32.mrf.mxu0
    %v149 = vadd.f32 0.0, %v148
    %v150 = vpop.f32.mrf.mxu0
    %151 = vmatprep.mubr.f32.mxu0 0.0
    %152 = vmatmul.mubr.f32.gmra.mxu0 %v50
    %v153 = vpop.f32.mrf.mxu0
    %v154 = vadd.f32 0.0, %v153
    %v155 = vpop.f32.mrf.mxu0
    %156 = vdwg.mxu0
    %vm157 = vcmask 130048
    %v158 = vsel %vm157, %v119, -inf
    %159 = vmax.xlane.f32.xlu0 %v158
    %v160 = vpop.xlane.xlu0 %159
    %v161 = vsel %vm157, %v124, -inf
    %162 = vmax.xlane.f32.xlu0 %v161
    %v163 = vpop.xlane.xlu0 %162
    %v164 = vsel %vm157, %v129, -inf
    %165 = vmax.xlane.f32.xlu0 %v164
    %v166 = vpop.xlane.xlu0 %165
    %v167 = vsel %vm157, %v134, -inf
    %168 = vmax.xlane.f32.xlu0 %v167
    %v169 = vpop.xlane.xlu0 %168
    %v170 = vsel %vm157, %v139, -inf
    %171 = vmax.xlane.f32.xlu0 %v170
    %v172 = vpop.xlane.xlu0 %171
    %v173 = vsel %vm157, %v144, -inf
    %174 = vmax.xlane.f32.xlu0 %v173
    %v175 = vpop.xlane.xlu0 %174
    %v176 = vsel %vm157, %v149, -inf
    %177 = vmax.xlane.f32.xlu0 %v176
    %v178 = vpop.xlane.xlu0 %177
    %vm179 = vcmask 125952
    %v180 = vsel %vm179, %v154, -inf
    %181 = vmax.xlane.f32.xlu0 %v180
    %v182 = vpop.xlane.xlu0 %181
    %v183 = vsub.f32 %v119, %v160
    %v184 = vsub.f32 %v124, %v163
    %v185 = vsub.f32 %v129, %v166
    %v186 = vsub.f32 %v134, %v169
    %v187 = vsub.f32 %v139, %v172
    %v188 = vsub.f32 %v144, %v175
    %v189 = vsub.f32 %v149, %v178
    %v190 = vsub.f32 %v154, %v182
    %v191 = vmul.f32 %v183, 1.442695
    %v192 = vpow.pop %v191
    %v193 = vmul.f32 %v184, 1.442695
    %v194 = vpow.pop %v193
    %v195 = vmul.f32 %v185, 1.442695
    %v196 = vpow.pop %v195
    %v197 = vmul.f32 %v186, 1.442695
    %v198 = vpow.pop %v197
    %v199 = vmul.f32 %v187, 1.442695
    %v200 = vpow.pop %v199
    %v201 = vmul.f32 %v188, 1.442695
    %v202 = vpow.pop %v201
    %v203 = vmul.f32 %v189, 1.442695
    %v204 = vpow.pop %v203
    %v205 = vmul.f32 %v190, 1.442695
    %v206 = vpow.pop %v205
    %v207 = vsel %vm157, %v192, 0.0
    %208 = vadd.xlane.f32.xlu0 %v207
    %v209 = vpop.xlane.xlu0 %208
    %v210 = vsel %vm157, %v194, 0.0
    %211 = vadd.xlane.f32.xlu0 %v210
    %v212 = vpop.xlane.xlu0 %211
    %v213 = vsel %vm157, %v196, 0.0
    %214 = vadd.xlane.f32.xlu0 %v213
    %v215 = vpop.xlane.xlu0 %214
    %v216 = vsel %vm157, %v198, 0.0
    %217 = vadd.xlane.f32.xlu0 %v216
    %v218 = vpop.xlane.xlu0 %217
    %v219 = vsel %vm157, %v200, 0.0
    %220 = vadd.xlane.f32.xlu0 %v219
    %v221 = vpop.xlane.xlu0 %220
    %v222 = vsel %vm157, %v202, 0.0
    %223 = vadd.xlane.f32.xlu0 %v222
    %v224 = vpop.xlane.xlu0 %223
    %v225 = vsel %vm157, %v204, 0.0
    %226 = vadd.xlane.f32.xlu0 %v225
    %v227 = vpop.xlane.xlu0 %226
    %v228 = vsel %vm179, %v206, 0.0
    %229 = vadd.xlane.f32.xlu0 %v228
    %v230 = vpop.xlane.xlu0 %229
    %v231 = vlog2.pop %v209
    %v232 = vmul.f32 %v231, 0.6931472
    %v233 = vlog2.pop %v212
    %v234 = vmul.f32 %v233, 0.6931472
    %v235 = vlog2.pop %v215
    %v236 = vmul.f32 %v235, 0.6931472
    %v237 = vlog2.pop %v218
    %v238 = vmul.f32 %v237, 0.6931472
    %v239 = vlog2.pop %v221
    %v240 = vmul.f32 %v239, 0.6931472
    %v241 = vlog2.pop %v224
    %v242 = vmul.f32 %v241, 0.6931472
    %v243 = vlog2.pop %v227
    %v244 = vmul.f32 %v243, 0.6931472
    %v245 = vlog2.pop %v230
    %v246 = vmul.f32 %v245, 0.6931472
    %v247 = vld [vmem:[%s2] sm:$0xff]
    %v248 = vld [vmem:[%s2 + $0x8] sm:$0xff]
    %v249 = vld [vmem:[%s2 + $0x10] sm:$0xff]
    %v250 = vld [vmem:[%s2 + $0x18] sm:$0xff]
    %v251 = vld [vmem:[%s2 + $0x20] sm:$0xff]
    %v252 = vld [vmem:[%s2 + $0x28] sm:$0xff]
    %v253 = vld [vmem:[%s2 + $0x30] sm:$0xff]
    %v254 = vld [vmem:[%s2 + $0x38] sm:$0xf]
    %v255 = vmul.f32 %v183, %v247
    %v256 = vmul.f32 %v184, %v248
    %v257 = vmul.f32 %v185, %v249
    %v258 = vmul.f32 %v186, %v250
    %v259 = vmul.f32 %v187, %v251
    %v260 = vmul.f32 %v188, %v252
    %v261 = vmul.f32 %v189, %v253
    %v262 = vmul.f32 %v190, %v254
    %v263 = vsel %vm157, %v255, 0.0
    %264 = vadd.xlane.f32.xlu0 %v263
    %v265 = vpop.xlane.xlu0 %264
    %v266 = vsel %vm157, %v256, 0.0
    %267 = vadd.xlane.f32.xlu0 %v266
    %v268 = vpop.xlane.xlu0 %267
    %v269 = vsel %vm157, %v257, 0.0
    %270 = vadd.xlane.f32.xlu0 %v269
    %v271 = vpop.xlane.xlu0 %270
    %v272 = vsel %vm157, %v258, 0.0
    %273 = vadd.xlane.f32.xlu0 %v272
    %v274 = vpop.xlane.xlu0 %273
    %v275 = vsel %vm157, %v259, 0.0
    %276 = vadd.xlane.f32.xlu0 %v275
    %v277 = vpop.xlane.xlu0 %276
    %v278 = vsel %vm157, %v260, 0.0
    %279 = vadd.xlane.f32.xlu0 %v278
    %v280 = vpop.xlane.xlu0 %279
    %v281 = vsel %vm157, %v261, 0.0
    %282 = vadd.xlane.f32.xlu0 %v281
    %v283 = vpop.xlane.xlu0 %282
    %v284 = vsel %vm179, %v262, 0.0
    %285 = vadd.xlane.f32.xlu0 %v284
    %v286 = vpop.xlane.xlu0 %285
    %s287 = smul.u32 0, 60
    %v288 = vlaneseq
    %v289 = vshrl.u32 %v288, 7
    %v290 = vadd.s32 %v289, 8
    %v291 = vadd.s32 %v289, 16
    %v292 = vadd.s32 %v289, 24
    %v293 = vadd.s32 %v289, 32
    %v294 = vadd.s32 %v289, 40
    %v295 = vadd.s32 %v289, 48
    %v296 = vadd.s32 %v289, 56
    %v297 = vstv %s287
    %v298 = vadd.s32 %v297, %v289
    %v299 = vadd.s32 %v297, %v290
    %v300 = vadd.s32 %v297, %v291
    %v301 = vadd.s32 %v297, %v292
    %v302 = vadd.s32 %v297, %v293
    %v303 = vadd.s32 %v297, %v294
    %v304 = vadd.s32 %v297, %v295
    %v305 = vadd.s32 %v297, %v296
    %vm306 = vcmp.lt.s32.totalorder %v298, 60
    %vm307 = vcmp.lt.s32.totalorder %v299, 60
    %vm308 = vcmp.lt.s32.totalorder %v300, 60
    %vm309 = vcmp.lt.s32.totalorder %v301, 60
    %vm310 = vcmp.lt.s32.totalorder %v302, 60
    %vm311 = vcmp.lt.s32.totalorder %v303, 60
    %vm312 = vcmp.lt.s32.totalorder %v304, 60
    %vm313 = vcmp.lt.s32.totalorder %v305, 60
    %v314 = vsub.f32 %v232, %v265
    %v315 = vsub.f32 %v234, %v268
    %v316 = vsub.f32 %v236, %v271
    %v317 = vsub.f32 %v238, %v274
    %v318 = vsub.f32 %v240, %v277
    %v319 = vsub.f32 %v242, %v280
    %v320 = vsub.f32 %v244, %v283
    %v321 = vsub.f32 %v246, %v286
    %v322 = vsel %vm306, %v314, 0.0
    %v323 = vsel %vm307, %v315, 0.0
    %v324 = vsel %vm308, %v316, 0.0
    %v325 = vsel %vm309, %v317, 0.0
    %v326 = vsel %vm310, %v318, 0.0
    %v327 = vsel %vm311, %v319, 0.0
    %v328 = vsel %vm312, %v320, 0.0
    %v329 = vsel %vm313, %v321, 0.0
    %vm330 = vcmask 7168
    %v331 = vsel %vm330, %v322, 0.0
    %v332 = vsel %vm330, %v323, 0.0
    %v333 = vadd.f32 %v331, %v332
    %v334 = vsel %vm330, %v324, 0.0
    %v335 = vadd.f32 %v333, %v334
    %v336 = vsel %vm330, %v325, 0.0
    %v337 = vadd.f32 %v335, %v336
    %v338 = vsel %vm330, %v326, 0.0
    %v339 = vadd.f32 %v337, %v338
    %v340 = vsel %vm330, %v327, 0.0
    %v341 = vadd.f32 %v339, %v340
    %v342 = vsel %vm330, %v328, 0.0
    %v343 = vadd.f32 %v341, %v342
    %vm344 = vcmask 3072
    %v345 = vsel %vm344, %v329, 0.0
    %v346 = vadd.f32 %v343, %v345
    %347 = vadd.xlane.f32.xlu0 %v346
    %v348 = vpop.xlane.xlu0 %347
    %v349 = vrot.slane %v348, 4
    %v350 = vadd.f32 %v348, %v349
    %v351 = vrot.slane %v350, 2
    %v352 = vadd.f32 %v350, %v351
    %v353 = vrot.slane %v352, 1
    %v354 = vadd.f32 %v352, %v353
    %s355 = vtos %v354
    %v356 = vstv %s355
    %357 = vst [vmem:[#allocation2] sm:$0xff] %v356
    // Predicated region
    $region14: #{tpu_custom_call.1} parent=1 // pred_check
      _
    $region15: #{tpu_custom_call.1} parent=1 // pred_check_branch
      %359 = sbr.rel (0) target = $region17
    $region16: #{tpu_custom_call.1} parent=1 // pred_region
      %s361 = ssub.s32 128, 128
      %362 = vsyncadd [#allocation3], %s361
      %s364 = sshll.u32 [#allocation2], 4
      %s365 = int_to_ptr.vmem [resolvable:$true] %s364
      %367 = dma.vmem_to_hbm [thread:$0]  %s365, 128, %s3, [#allocation3]
    $region17: #{tpu_custom_call.1} parent=1 // pred_fallthru
      _
    // Predicated region
    $region18: #{tpu_custom_call.1} parent=1 // pred_check
      _
    $region19: #{tpu_custom_call.1} parent=1 // pred_check_branch
      %369 = sbr.rel (0) target = $region21
    $region20: #{tpu_custom_call.1} parent=1 // pred_region
      %370 = dma.done [#allocation3], 128
    $region21: #{tpu_custom_call.1} parent=1 // pred_fallthru
      _
    %371 = vsyncpa [#allocation3], 1

</llo_original>
